<compile_context>
chip_gen: v7x
topology: tpu7x:2x2x1
jax: 0.10.0
libtpu: 0.0.40
codegen_flags: <defaults>
</compile_context>

<pallas_src>
import math
from functools import partial

import jax
import jax.numpy as jnp
from jax import lax
from jax.experimental import pallas as pl
from jax.experimental.pallas import tpu as pltpu


def _gelu_exact(x):
    # PyTorch nn.GELU() default = exact erf-based GELU (computed in f32).
    return 0.5 * x * (1.0 + lax.erf(x * (1.0 / math.sqrt(2.0))))


def _adapter_kernel(x_ref, w1_ref, b1_ref, w2_ref, b2_ref, o_ref, *, skip: bool):
    # Load x once in its native dtype; matmuls accumulate in f32 on the MXU.
    x = x_ref[...]
    b1 = b1_ref[...].astype(jnp.float32)   # read biases once (hoisted broadcasts)
    b2 = b2_ref[...].astype(jnp.float32)

    # Down-projection (MXU), f32 accumulation.
    h = jnp.dot(x, w1_ref[...], preferred_element_type=jnp.float32) + b1
    # Exact GELU (EUP/VPU) in f32.
    h = _gelu_exact(h)
    # Up-projection (MXU); feed the MXU in the weight dtype (bf16 stays bf16).
    y = jnp.dot(h.astype(w2_ref.dtype), w2_ref[...],
                preferred_element_type=jnp.float32) + b2

    if skip:
        y = y + x.astype(jnp.float32)
    o_ref[...] = y.astype(o_ref.dtype)


def _choose_tm(N, dim, down_pad, dtype, budget_bytes=32 * 1024 * 1024):
    """Pick the largest row tile that fits the VMEM budget (multiple of 16 sublanes)."""
    itemsize = jnp.dtype(dtype).itemsize
    # Single-buffered resident weights + biases.
    resident = (2 * dim * down_pad + down_pad + dim) * itemsize
    # Per-row cost: double-buffered x & out tiles + f32 intermediates (h, y).
    per_row = 2 * 2 * dim * itemsize + 4 * (dim + down_pad)
    avail = max(budget_bytes - resident, per_row * 16)
    tm = int(avail // per_row)
    tm = max(16, min(1024, (tm // 16) * 16))
    if tm >= N:
        if N >= 256:
            # Keep >=2 grid steps so both v7x TensorCores / v6e megacore get work.
            tm = (((N + 1) // 2) + 15) // 16 * 16
        else:
            tm = N  # single block covering all rows (full-dim rule, any N allowed)
    return tm


def adapter_pallas(x2d, w1, b1, w2, b2, *, skip_connect=True, tm=None):
    """x2d: (N, dim); w1: (dim, down); b1: (1, down); w2: (down, dim); b2: (1, dim)."""
    N, dim = x2d.shape
    down = w1.shape[1]

    # Pad the bottleneck dim to a lane-aligned multiple of 128 (weights only; one-time,
    # zero columns/rows contribute exactly zero to the result).
    down_pad = max(128, ((down + 127) // 128) * 128)
    if down_pad != down:
        pad = down_pad - down
        w1 = jnp.pad(w1, ((0, 0), (0, pad)))
        b1 = jnp.pad(b1, ((0, 0), (0, pad)))
        w2 = jnp.pad(w2, ((0, pad), (0, 0)))

    if tm is None:
        tm = _choose_tm(N, dim, down_pad, x2d.dtype)
    grid = (pl.cdiv(N, tm),)

    kernel = partial(_adapter_kernel, skip=skip_connect)

    itemsize = jnp.dtype(x2d.dtype).itemsize
    cost = pl.CostEstimate(
        flops=4 * N * dim * down_pad + 3 * N * dim,
        transcendentals=N * down_pad,
        bytes_accessed=(2 * N * dim + 2 * dim * down_pad + down_pad + dim) * itemsize,
    )

    return pl.pallas_call(
        kernel,
        out_shape=jax.ShapeDtypeStruct((N, dim), x2d.dtype),
        grid_spec=pltpu.PrefetchScalarGridSpec(
            num_scalar_prefetch=0,
            grid=grid,
            in_specs=[
                # x tile: gridded, double-buffered by the pipeline.
                pl.BlockSpec((tm, dim), lambda i: (i, 0)),
                # Weights/biases: whole-array VMEM residents, single-buffered.
                pl.BlockSpec(memory_space=pltpu.MemorySpace.VMEM),   # w1
                pl.BlockSpec(memory_space=pltpu.MemorySpace.VMEM),   # b1
                pl.BlockSpec(memory_space=pltpu.MemorySpace.VMEM),   # w2
                pl.BlockSpec(memory_space=pltpu.MemorySpace.VMEM),   # b2
            ],
            out_specs=pl.BlockSpec((tm, dim), lambda i: (i, 0)),
        ),
        compiler_params=pltpu.CompilerParams(
            dimension_semantics=("parallel",),
            vmem_limit_bytes=48 * 1024 * 1024,
        ),
        cost_estimate=cost,
    )(x2d, w1, b1, w2, b2)


def adapter_forward(x, w1, b1, w2, b2, skip_connect=True):
    """x: (batch, seq, dim) -> (batch, seq, dim). Glue reshape in plain JAX."""
    B, S, D = x.shape
    out = adapter_pallas(x.reshape(B * S, D), w1, b1, w2, b2, skip_connect=skip_connect)
    return out.reshape(B, S, D)


def _init_linear(key, fan_in, fan_out):
    """Deterministic PyTorch-style nn.Linear init: kaiming-uniform weight, uniform bias.
    Returns weight already transposed to (fan_in, fan_out)."""
    kw, kb = jax.random.split(key)
    bound_w = 1.0 / math.sqrt(fan_in)
    w = jax.random.uniform(kw, (fan_in, fan_out), jnp.float32, -bound_w, bound_w)
    b = jax.random.uniform(kb, (1, fan_out), jnp.float32, -bound_w, bound_w)
    return w, b


if __name__ == "__main__":
    key = jax.random.PRNGKey(0)
    k_x, k_l1, k_l2 = jax.random.split(key, 3)

    batch, seq, dim = 2, 8, 32
    mlp_ratio = 0.25
    down_dim = int(dim * mlp_ratio)  # 8

    x = jax.random.normal(k_x, (batch, seq, dim), jnp.float32)
    w1, b1 = _init_linear(k_l1, dim, down_dim)     # D_fc1: dim -> down_dim
    w2, b2 = _init_linear(k_l2, down_dim, dim)     # D_fc2: down_dim -> dim

    out = adapter_forward(x, w1, b1, w2, b2, skip_connect=True)
    out = jax.block_until_ready(out)

    # Pure-JAX reference check (same math as the PyTorch forward).
    h_ref = x @ w1 + b1[0]
    h_ref = 0.5 * h_ref * (1.0 + lax.erf(h_ref / math.sqrt(2.0)))
    ref_y = h_ref @ w2 + b2[0]
    ref = x + ref_y
    assert jnp.allclose(out, ref, atol=1e-5, rtol=1e-5), "mismatch vs reference (skip)"

    # skip_connect=False path honored in-kernel (static flag).
    out_ns = jax.block_until_ready(
        adapter_forward(x, w1, b1, w2, b2, skip_connect=False))
    assert jnp.allclose(out_ns, ref_y, atol=1e-5, rtol=1e-5), "mismatch vs reference (no skip)"

    print("KERNEL_OK")
</pallas_src>

<mosaic_0001>
module attributes {stable_mosaic.version = 11 : i64} {
  func.func @_adapter_kernel(%arg0: i32, %arg1: memref<16x32xf32, #tpu.memory_space<vmem>>, %arg2: memref<32x128xf32, #tpu.memory_space<vmem>>, %arg3: memref<1x128xf32, #tpu.memory_space<vmem>>, %arg4: memref<128x32xf32, #tpu.memory_space<vmem>>, %arg5: memref<1x32xf32, #tpu.memory_space<vmem>>, %arg6: memref<16x32xf32, #tpu.memory_space<vmem>>) attributes {dimension_semantics = [#tpu.dimension_semantics<parallel>], iteration_bounds = array<i64: 1>, scalar_prefetch = 0 : i64, scratch_operands = 0 : i64, tpu.core_type = #tpu.core_type<tc>, window_params = [{transform_indices = @transform_0, window_bounds = array<i64: 16, 32>}, {pipeline_mode = #tpu.pipeline_mode<synchronous>, transform_indices = @transform_1, window_bounds = array<i64: 32, 128>}, {pipeline_mode = #tpu.pipeline_mode<synchronous>, transform_indices = @transform_2, window_bounds = array<i64: 1, 128>}, {pipeline_mode = #tpu.pipeline_mode<synchronous>, transform_indices = @transform_3, window_bounds = array<i64: 128, 32>}, {pipeline_mode = #tpu.pipeline_mode<synchronous>, transform_indices = @transform_4, window_bounds = array<i64: 1, 32>}, {transform_indices = @transform_5, window_bounds = array<i64: 16, 32>}]} {
    %c0 = arith.constant 0 : index
    %c0_0 = arith.constant 0 : index
    %0 = vector.load %arg1[%c0, %c0_0] : memref<16x32xf32, #tpu.memory_space<vmem>>, vector<16x32xf32>
    %c0_1 = arith.constant 0 : index
    %c0_2 = arith.constant 0 : index
    %1 = vector.load %arg3[%c0_1, %c0_2] : memref<1x128xf32, #tpu.memory_space<vmem>>, vector<1x128xf32>
    %c0_3 = arith.constant 0 : index
    %c0_4 = arith.constant 0 : index
    %2 = vector.load %arg5[%c0_3, %c0_4] : memref<1x32xf32, #tpu.memory_space<vmem>>, vector<1x32xf32>
    %c0_5 = arith.constant 0 : index
    %c0_6 = arith.constant 0 : index
    %3 = vector.load %arg2[%c0_5, %c0_6] : memref<32x128xf32, #tpu.memory_space<vmem>>, vector<32x128xf32>
    %cst = arith.constant dense<0.000000e+00> : vector<16x128xf32>
    %4 = tpu.matmul %0, %3, %cst {dimension_numbers = #tpu.dot_dimension_numbers<[1], [0], [0], [1], [0, 0, 1, 1], [], []>} : vector<16x32xf32>, vector<32x128xf32>, vector<16x128xf32> -> vector<16x128xf32>
    %5 = vector.broadcast %1 : vector<1x128xf32> to vector<16x128xf32>
    %6 = arith.addf %4, %5 : vector<16x128xf32>
    %cst_7 = arith.constant 5.000000e-01 : f32
    %7 = vector.broadcast %cst_7 : f32 to vector<16x128xf32>
    %8 = arith.mulf %7, %6 : vector<16x128xf32>
    %cst_8 = arith.constant 0.707106769 : f32
    %9 = vector.broadcast %cst_8 : f32 to vector<16x128xf32>
    %10 = arith.mulf %6, %9 : vector<16x128xf32>
    %11 = math.erf %10 : vector<16x128xf32>
    %cst_9 = arith.constant 1.000000e+00 : f32
    %12 = vector.broadcast %cst_9 : f32 to vector<16x128xf32>
    %13 = arith.addf %12, %11 : vector<16x128xf32>
    %14 = arith.mulf %8, %13 : vector<16x128xf32>
    %c0_10 = arith.constant 0 : index
    %c0_11 = arith.constant 0 : index
    %15 = vector.load %arg4[%c0_10, %c0_11] : memref<128x32xf32, #tpu.memory_space<vmem>>, vector<128x32xf32>
    %cst_12 = arith.constant dense<0.000000e+00> : vector<16x32xf32>
    %16 = tpu.matmul %14, %15, %cst_12 {dimension_numbers = #tpu.dot_dimension_numbers<[1], [0], [0], [1], [0, 0, 1, 1], [], []>} : vector<16x128xf32>, vector<128x32xf32>, vector<16x32xf32> -> vector<16x32xf32>
    %17 = vector.broadcast %2 : vector<1x32xf32> to vector<16x32xf32>
    %18 = arith.addf %16, %17 : vector<16x32xf32>
    %19 = arith.addf %18, %0 : vector<16x32xf32>
    %c0_13 = arith.constant 0 : index
    %c0_14 = arith.constant 0 : index
    %20 = vector.load %arg6[%c0_13, %c0_14] : memref<16x32xf32, #tpu.memory_space<vmem>>, vector<16x32xf32>
    tpu.vector_store %arg6[%c0_13, %c0_14], %19 {strides = array<i32>} : memref<16x32xf32, #tpu.memory_space<vmem>>, vector<16x32xf32>,
    return
  }
  func.func @transform_0(%arg0: i32) -> (i32, i32) {
    %c0_i32 = arith.constant 0 : i32
    %c0_i32_0 = arith.constant 0 : i32
    return %arg0, %c0_i32 : i32, i32
  }
  func.func @transform_1(%arg0: i32) -> (i32, i32) {
    %c0_i32 = arith.constant 0 : i32
    %c0_i32_0 = arith.constant 0 : i32
    %c0_i32_1 = arith.constant 0 : i32
    return %c0_i32, %c0_i32_0 : i32, i32
  }
  func.func @transform_2(%arg0: i32) -> (i32, i32) {
    %c0_i32 = arith.constant 0 : i32
    %c0_i32_0 = arith.constant 0 : i32
    %c0_i32_1 = arith.constant 0 : i32
    return %c0_i32, %c0_i32_0 : i32, i32
  }
  func.func @transform_3(%arg0: i32) -> (i32, i32) {
    %c0_i32 = arith.constant 0 : i32
    %c0_i32_0 = arith.constant 0 : i32
    %c0_i32_1 = arith.constant 0 : i32
    return %c0_i32, %c0_i32_0 : i32, i32
  }
  func.func @transform_4(%arg0: i32) -> (i32, i32) {
    %c0_i32 = arith.constant 0 : i32
    %c0_i32_0 = arith.constant 0 : i32
    %c0_i32_1 = arith.constant 0 : i32
    return %c0_i32, %c0_i32_0 : i32, i32
  }
  func.func @transform_5(%arg0: i32) -> (i32, i32) {
    %c0_i32 = arith.constant 0 : i32
    %c0_i32_0 = arith.constant 0 : i32
    return %arg0, %c0_i32 : i32, i32
  }
}

</mosaic_0001>

<llo_original>
// kernel: tpu_custom_call.1
$region0: #{tpu_custom_call.1}
  #allocation0 [shape = 'u32[]', space=smem, size = 0x4, offset = 0x4, fixed_abs, tag = 'smem constant byte address 0x4 - core index']
  #allocation1 [shape = 'u32[144,128]{1,0:T(1,128)}', space=vmem, size = 0x12000, scoped, tag = 'internal scratch']
  %s0 = inlined_call_operand.vmem [shape: f32[16,32], index: 0, kind: input, shape index: {}]
  %s1 = inlined_call_operand.vmem [shape: f32[32,128], index: 1, kind: input, shape index: {}]
  %s2 = inlined_call_operand.vmem [shape: f32[1,128], index: 2, kind: input, shape index: {}]
  %s3 = inlined_call_operand.vmem [shape: f32[128,32], index: 3, kind: input, shape index: {}]
  %s4 = inlined_call_operand.vmem [shape: f32[1,32], index: 4, kind: input, shape index: {}]
  %s5 = inlined_call_operand.hbm [shape: f32[16,32], index: 5, kind: output, shape index: {}]
  %s6 = sld [smem:[#allocation0]]
  $region30: #{tpu_custom_call.1} parent=0
    _
  %s8 = ssub.s32 1, %s6
  %s9 = scalar_select 0, %s8, %s6
  $region1: #{tpu_custom_call.1} parent=0
    #allocation2 [shape = 'u8[8192]{0}', space=vmem, size = 0x2000, scoped, tag = 'output window, operand 0, single buffered']
    #allocation3 [shape = 's32[1]{0}', space=sflag, size = 0x4, scoped, tag = 'scoped memory for tpu_custom_call.1']
    %10 = vsyncpa [#allocation3], 0
    // Predicated region
    $region2: #{tpu_custom_call.1} parent=1 // pred_check
      _
    $region3: #{tpu_custom_call.1} parent=1 // pred_check_branch
      %12 = sbr.rel (0) target = $region5
    $region4: #{tpu_custom_call.1} parent=1 // pred_region
      _
    $region5: #{tpu_custom_call.1} parent=1 // pred_fallthru
      _
    // Predicated region
    $region6: #{tpu_custom_call.1} parent=1 // pred_check
      _
    $region7: #{tpu_custom_call.1} parent=1 // pred_check_branch
      %14 = sbr.rel (0) target = $region9
    $region8: #{tpu_custom_call.1} parent=1 // pred_region
      _
    $region9: #{tpu_custom_call.1} parent=1 // pred_fallthru
      _
    // Predicated region
    $region10: #{tpu_custom_call.1} parent=1 // pred_check
      _
    $region11: #{tpu_custom_call.1} parent=1 // pred_check_branch
      %16 = sbr.rel (0) target = $region13
    $region12: #{tpu_custom_call.1} parent=1 // pred_region
      _
    $region13: #{tpu_custom_call.1} parent=1 // pred_fallthru
      _
    // Predicated region
    $region14: #{tpu_custom_call.1} parent=1 // pred_check
      _
    $region15: #{tpu_custom_call.1} parent=1 // pred_check_branch
      %18 = sbr.rel (0) target = $region17
    $region16: #{tpu_custom_call.1} parent=1 // pred_region
      _
    $region17: #{tpu_custom_call.1} parent=1 // pred_fallthru
      _
    // Predicated region
    $region18: #{tpu_custom_call.1} parent=1 // pred_check
      _
    $region19: #{tpu_custom_call.1} parent=1 // pred_check_branch
      %20 = sbr.rel (0) target = $region21
    $region20: #{tpu_custom_call.1} parent=1 // pred_region
      _
    $region21: #{tpu_custom_call.1} parent=1 // pred_fallthru
      _
    %v21 = vld [vmem:[%s0] sm:$0xff]
    %v22 = vld [vmem:[%s0 + $0x8] sm:$0xff]
    %v23 = vld [vmem:[%s2] sm:$0x1]
    %v24 = vld [vmem:[%s4] sm:$0x1]
    %v25 = vld [vmem:[%s1] sm:$0xff]
    %v26 = vld [vmem:[%s1 + $0x8] sm:$0xff]
    %v27 = vld [vmem:[%s1 + $0x10] sm:$0xff]
    %v28 = vld [vmem:[%s1 + $0x18] sm:$0xff]
    %v30 = vlaneseq
    %v31 = vshrl.u32 %v30, 7
    %v32 = vsub.s32 0, %v31
    %v33 = vrot.slane %v23, %v32
    %vm35 = vcmask 261120
    %v37 = vsel %vm35, %v21, 0
    %v40 = vsel %vm35, %v22, 0
    %42 = vmatprep.subr.mxu0 0.0
    %43 = vmatpush1.msra.mxu0 %v25
    %44 = vmatprep.subr.mxu0 0.0
    %45 = vmatpush1.msra.mxu0 %v26
    %46 = vmatprep.subr.mxu0 0.0
    %47 = vmatpush1.msra.mxu0 %v27
    %48 = vmatprep.subr.mxu0 0.0
    %49 = vmatpush1.msra.mxu0 %v28
    %50 = vmatprep.subr.mxu0 0.0
    %51 = vmatpush1.msra.mxu0 0.0
    %52 = vmatprep.subr.mxu0 0.0
    %53 = vmatpush1.msra.mxu0 0.0
    %54 = vmatprep.subr.mxu0 0.0
    %55 = vmatpush1.msra.mxu0 0.0
    %56 = vmatprep.subr.mxu0 0.0
    %57 = vmatpush1.msra.mxu0 0.0
    %58 = vmatprep.subr.mxu0 0.0
    %59 = vmatpush1.msra.mxu0 0.0
    %60 = vmatprep.subr.mxu0 0.0
    %61 = vmatpush1.msra.mxu0 0.0
    %62 = vmatprep.subr.mxu0 0.0
    %63 = vmatpush1.msra.mxu0 0.0
    %64 = vmatprep.subr.mxu0 0.0
    %65 = vmatpush1.msra.mxu0 0.0
    %66 = vmatprep.subr.mxu0 0.0
    %67 = vmatpush1.msra.mxu0 0.0
    %68 = vmatprep.subr.mxu0 0.0
    %69 = vmatpush1.msra.mxu0 0.0
    %70 = vmatprep.subr.mxu0 0.0
    %71 = vmatpush1.msra.mxu0 0.0
    %72 = vmatprep.subr.mxu0 0.0
    %73 = vmatpush1.msra.mxu0 0.0
    %74 = vmatprep.subr.mxu0 0.0
    %75 = vmatpush1.msra.mxu0 0.0
    %76 = vmatprep.subr.mxu0 0.0
    %77 = vmatpush1.msra.mxu0 0.0
    %78 = vmatprep.subr.mxu0 0.0
    %79 = vmatpush1.msra.mxu0 0.0
    %80 = vmatprep.subr.mxu0 0.0
    %81 = vmatpush1.msra.mxu0 0.0
    %82 = vmatprep.subr.mxu0 0.0
    %83 = vmatpush1.msra.mxu0 0.0
    %84 = vmatprep.subr.mxu0 0.0
    %85 = vmatpush1.msra.mxu0 0.0
    %86 = vmatprep.subr.mxu0 0.0
    %87 = vmatpush1.msra.mxu0 0.0
    %88 = vmatprep.subr.mxu0 0.0
    %89 = vmatpush1.msra.mxu0 0.0
    %90 = vmatprep.subr.mxu0 0.0
    %91 = vmatpush1.msra.mxu0 0.0
    %92 = vmatprep.subr.mxu0 0.0
    %93 = vmatpush1.msra.mxu0 0.0
    %94 = vmatprep.subr.mxu0 0.0
    %95 = vmatpush1.msra.mxu0 0.0
    %96 = vmatprep.subr.mxu0 0.0
    %97 = vmatpush1.msra.mxu0 0.0
    %98 = vmatprep.subr.mxu0 0.0
    %99 = vmatpush1.msra.mxu0 0.0
    %100 = vmatprep.subr.mxu0 0.0
    %101 = vmatpush1.msra.mxu0 0.0
    %102 = vmatprep.subr.mxu0 0.0
    %103 = vmatpush1.msra.mxu0 0.0
    %104 = vmatprep.subr.mxu0 0.0
    %105 = vmatpush1.msra.mxu0 0.0
    %106 = vmatprep.mubr.f32.mxu0 0.0
    %107 = vmatmul.mubr.f32.gmra.mrb[0].mxu0 %v37
    %v108 = vpop.f32.mrb[0].mxu0
    %v109 = vadd.f32 %v33, %v108
    %v110 = vpop.f32.mrb[0].mxu0
    %111 = vmatprep.mubr.f32.mxu0 0.0
    %112 = vmatmul.mubr.f32.gmra.mrb[0].mxu0 %v40
    %v113 = vpop.f32.mrb[0].mxu0
    %v114 = vadd.f32 %v33, %v113
    %v115 = vpop.f32.mrb[0].mxu0
    %116 = vdwg.mxu0
    %v117 = vmul.f32 %v109, 0.5
    %v118 = vmul.f32 %v114, 0.5
    %v119 = vmul.f32 %v109, 0.70710677
    %v120 = vmul.f32 %v114, 0.70710677
    %v121 = verf.f32.pop %v119
    %v122 = verf.f32.pop %v120
    %v123 = vadd.f32 %v121, 1.0
    %v124 = vadd.f32 %v122, 1.0
    %v125 = vmul.f32 %v117, %v123
    %v126 = vmul.f32 %v118, %v124
    %v127 = vld [vmem:[%s3] sm:$0xff]
    %v128 = vld [vmem:[%s3 + $0x8] sm:$0xff]
    %v129 = vld [vmem:[%s3 + $0x10] sm:$0xff]
    %v130 = vld [vmem:[%s3 + $0x18] sm:$0xff]
    %v131 = vld [vmem:[%s3 + $0x20] sm:$0xff]
    %v132 = vld [vmem:[%s3 + $0x28] sm:$0xff]
    %v133 = vld [vmem:[%s3 + $0x30] sm:$0xff]
    %v134 = vld [vmem:[%s3 + $0x38] sm:$0xff]
    %v135 = vld [vmem:[%s3 + $0x40] sm:$0xff]
    %v136 = vld [vmem:[%s3 + $0x48] sm:$0xff]
    %v137 = vld [vmem:[%s3 + $0x50] sm:$0xff]
    %v138 = vld [vmem:[%s3 + $0x58] sm:$0xff]
    %v139 = vld [vmem:[%s3 + $0x60] sm:$0xff]
    %v140 = vld [vmem:[%s3 + $0x68] sm:$0xff]
    %v141 = vld [vmem:[%s3 + $0x70] sm:$0xff]
    %v142 = vld [vmem:[%s3 + $0x78] sm:$0xff]
    %v144 = vlaneseq
    %v145 = vshrl.u32 %v144, 7
    %v146 = vsub.s32 0, %v145
    %v147 = vrot.slane %v24, %v146
    %149 = vmatprep.subr.mxu0 0.0
    %150 = vmatpush1.msra.mxu0 %v127
    %151 = vmatprep.subr.mxu0 0.0
    %152 = vmatpush1.msra.mxu0 %v128
    %153 = vmatprep.subr.mxu0 0.0
    %154 = vmatpush1.msra.mxu0 %v129
    %155 = vmatprep.subr.mxu0 0.0
    %156 = vmatpush1.msra.mxu0 %v130
    %157 = vmatprep.subr.mxu0 0.0
    %158 = vmatpush1.msra.mxu0 %v131
    %159 = vmatprep.subr.mxu0 0.0
    %160 = vmatpush1.msra.mxu0 %v132
    %161 = vmatprep.subr.mxu0 0.0
    %162 = vmatpush1.msra.mxu0 %v133
    %163 = vmatprep.subr.mxu0 0.0
    %164 = vmatpush1.msra.mxu0 %v134
    %165 = vmatprep.subr.mxu0 0.0
    %166 = vmatpush1.msra.mxu0 %v135
    %167 = vmatprep.subr.mxu0 0.0
    %168 = vmatpush1.msra.mxu0 %v136
    %169 = vmatprep.subr.mxu0 0.0
    %170 = vmatpush1.msra.mxu0 %v137
    %171 = vmatprep.subr.mxu0 0.0
    %172 = vmatpush1.msra.mxu0 %v138
    %173 = vmatprep.subr.mxu0 0.0
    %174 = vmatpush1.msra.mxu0 %v139
    %175 = vmatprep.subr.mxu0 0.0
    %176 = vmatpush1.msra.mxu0 %v140
    %177 = vmatprep.subr.mxu0 0.0
    %178 = vmatpush1.msra.mxu0 %v141
    %179 = vmatprep.subr.mxu0 0.0
    %180 = vmatpush1.msra.mxu0 %v142
    %181 = vmatprep.subr.mxu0 0.0
    %182 = vmatpush1.msra.mxu0 0.0
    %183 = vmatprep.subr.mxu0 0.0
    %184 = vmatpush1.msra.mxu0 0.0
    %185 = vmatprep.subr.mxu0 0.0
    %186 = vmatpush1.msra.mxu0 0.0
    %187 = vmatprep.subr.mxu0 0.0
    %188 = vmatpush1.msra.mxu0 0.0
    %189 = vmatprep.subr.mxu0 0.0
    %190 = vmatpush1.msra.mxu0 0.0
    %191 = vmatprep.subr.mxu0 0.0
    %192 = vmatpush1.msra.mxu0 0.0
    %193 = vmatprep.subr.mxu0 0.0
    %194 = vmatpush1.msra.mxu0 0.0
    %195 = vmatprep.subr.mxu0 0.0
    %196 = vmatpush1.msra.mxu0 0.0
    %197 = vmatprep.subr.mxu0 0.0
    %198 = vmatpush1.msra.mxu0 0.0
    %199 = vmatprep.subr.mxu0 0.0
    %200 = vmatpush1.msra.mxu0 0.0
    %201 = vmatprep.subr.mxu0 0.0
    %202 = vmatpush1.msra.mxu0 0.0
    %203 = vmatprep.subr.mxu0 0.0
    %204 = vmatpush1.msra.mxu0 0.0
    %205 = vmatprep.subr.mxu0 0.0
    %206 = vmatpush1.msra.mxu0 0.0
    %207 = vmatprep.subr.mxu0 0.0
    %208 = vmatpush1.msra.mxu0 0.0
    %209 = vmatprep.subr.mxu0 0.0
    %210 = vmatpush1.msra.mxu0 0.0
    %211 = vmatprep.subr.mxu0 0.0
    %212 = vmatpush1.msra.mxu0 0.0
    %213 = vmatprep.mubr.f32.mxu0 0.0
    %214 = vmatmul.mubr.f32.gmra.mrb[0].mxu0 %v125
    %v215 = vpop.f32.mrb[0].mxu0
    %v216 = vadd.f32 %v147, %v215
    %v217 = vpop.f32.mrb[0].mxu0
    %218 = vmatprep.mubr.f32.mxu0 0.0
    %219 = vmatmul.mubr.f32.gmra.mrb[0].mxu0 %v126
    %v220 = vpop.f32.mrb[0].mxu0
    %v221 = vadd.f32 %v147, %v220
    %v222 = vpop.f32.mrb[0].mxu0
    %223 = vdwg.mxu0
    %v224 = vadd.f32 %v216, %v21
    %v225 = vadd.f32 %v221, %v22
    %226 = vst.msk [vmem:[#allocation2] sm:$0xff] %vm35, %v224
    %227 = vst.msk [vmem:[#allocation2 + $0x8] sm:$0xff] %vm35, %v225
    // Predicated region
    $region22: #{tpu_custom_call.1} parent=1 // pred_check
      _
    $region23: #{tpu_custom_call.1} parent=1 // pred_check_branch
      %229 = sbr.rel (0) target = $region25
    $region24: #{tpu_custom_call.1} parent=1 // pred_region
      %s231 = ssub.s32 256, 256
      %232 = vsyncadd [#allocation3], %s231
      %s233 = sshll.u32 [#allocation2], 4
      %s234 = int_to_ptr.vmem [resolvable:$true] %s233
      %239 = dma.vmem_to_hbm [thread:$0]  %s234, 256, %s5, [#allocation3], 128, 128, 8
    $region25: #{tpu_custom_call.1} parent=1 // pred_fallthru
      _
    // Predicated region
    $region26: #{tpu_custom_call.1} parent=1 // pred_check
      _
    $region27: #{tpu_custom_call.1} parent=1 // pred_check_branch
      %241 = sbr.rel (0) target = $region29
    $region28: #{tpu_custom_call.1} parent=1 // pred_region
      %242 = dma.done [#allocation3], 256
    $region29: #{tpu_custom_call.1} parent=1 // pred_fallthru
      _
    %243 = vsyncpa [#allocation3], 1

</llo_original>
